<compile_context>
chip_gen: v7x
topology: tpu7x:2x2x1
jax: 0.10.0
libtpu: 0.0.40
codegen_flags: <defaults>
</compile_context>

<pallas_src>
import functools

import jax
import jax.numpy as jnp
from jax import lax
from jax.experimental import pallas as pl
from jax.experimental.pallas import tpu as pltpu


def _round_up(x, m):
    return ((x + m - 1) // m) * m


def _dual_energy_rof_kernel(y_ref, halo_ref, img_ref, out_ref, *, M):
    """One row-tile: y_ref (2, TM, N), halo_ref (1, 8, N), img_ref (1, TM, N),
    out_ref (1, 1, 128) partial energy (broadcast of a scalar)."""
    i = pl.program_id(0)

    y_h = y_ref[0]                      # (TM, N) horizontal dual component
    y_v = y_ref[1]                      # (TM, N) vertical dual component
    img = img_ref[0]                    # (TM, N) observed image
    TM, N = img.shape
    r0 = i * TM                         # global row offset of this tile

    # Cheap masks: (TM, 1) row ids + (1, N) column ids, broadcast inside selects.
    row_l = lax.broadcasted_iota(jnp.int32, (TM, 1), 0)
    row_g = row_l + r0
    col = lax.broadcasted_iota(jnp.int32, (1, N), 1)

    # Horizontal backward difference (fully intra-tile, along lanes):
    # zero the last column once, then d_h[:, j] = yh[:, j] - yh[:, j-1]; the wrapped
    # (zeroed) column gives d_h[:, 0] = y_h[:, 0] and d_h[:, -1] = -y_h[:, -2].
    yh = jnp.where(col < N - 1, y_h, 0.0)
    d_h = yh - pltpu.roll(yh, 1, 1)     # XLU lane rotate

    # Vertical backward difference (needs one halo row from the previous tile):
    # zero the GLOBAL last row once, shift rows down by one (sublane roll), and replace
    # the wrapped first row of the shifted operand with the previous tile's last y[1]
    # row (zero for the very first tile).
    yv = jnp.where(row_g != M - 1, y_v, 0.0)
    prev = jnp.where(i == 0, jnp.zeros((1, N), jnp.float32), halo_ref[0, 7:8, :])
    yv_shift = pltpu.roll(yv, 1, 0)     # XLU sublane rotate
    yv_shift = jnp.where(row_l == 0, prev, yv_shift)
    d_v = yv - yv_shift

    # Fused residual / square / scale / reduce; mask rows past M (edge-tile padding).
    r = img - (d_h + d_v)
    r = jnp.where(row_g < M, r, 0.0)
    partial = -0.5 * jnp.sum(r * r)

    out_ref[...] = jnp.broadcast_to(partial, (1, 1, 128))


@functools.partial(jax.jit, static_argnames=("row_tile",))
def dual_energy_rof(y, im_obs, row_tile=None):
    """y: (2, M, N) f32 dual variable; im_obs: (M, N) or (1, M, N) f32 observed image.

    Returns the scalar dual energy -0.5 * sum((im_obs - div(y))^2).
    """
    if im_obs.ndim == 2:
        im_obs = im_obs[None]
    y = y.astype(jnp.float32)
    im_obs = im_obs.astype(jnp.float32)
    _, M, N = y.shape

    # ---- tile-size selection (per-generation) ----
    if row_tile is None:
        try:
            info = pltpu.get_tpu_info()
            vmem_cap = int(getattr(info, "vmem_capacity_bytes", 64 * 1024 * 1024))
        except Exception:
            vmem_cap = 64 * 1024 * 1024
        # ~2 MiB per plane tile on 64 MiB-VMEM parts (v7x), ~4 MiB on 128 MiB parts.
        plane_tile_bytes = (2 if vmem_cap <= 64 * 1024 * 1024 else 4) * 1024 * 1024
        row_tile = max(8, plane_tile_bytes // (N * 4))
    TM = max(8, (int(row_tile) // 8) * 8)          # multiple of 8 sublanes
    TM = min(TM, _round_up(M, 8))                  # no bigger than the (padded) image
    num_tiles = (M + TM - 1) // TM
    halo_blocks = TM // 8

    # VMEM budget: (2 y planes + 1 image plane + 8-row halo) double-buffered, + tiny output.
    tile_bytes = TM * N * 4
    needed = 2 * (3 * tile_bytes + 8 * N * 4) + 2 * 128 * 4
    vmem_limit = int(min(48 * 1024 * 1024, max(2 * needed, 16 * 1024 * 1024)))

    kernel = functools.partial(_dual_energy_rof_kernel, M=M)

    partials = pl.pallas_call(
        kernel,
        out_shape=jax.ShapeDtypeStruct((num_tiles, 1, 128), jnp.float32),
        grid=(num_tiles,),
        in_specs=[
            # Both channels of y for this row tile.
            pl.BlockSpec((2, TM, N), lambda i: (0, i, 0)),
            # Halo: the 8-row block of y[1] ending at row i*TM - 1 (clamped; unused at i==0).
            pl.BlockSpec((1, 8, N),
                         lambda i: (1, jnp.maximum(i * halo_blocks - 1, 0), 0)),
            # Observed image for this row tile.
            pl.BlockSpec((1, TM, N), lambda i: (0, i, 0)),
        ],
        out_specs=pl.BlockSpec((1, 1, 128), lambda i: (i, 0, 0)),
        compiler_params=pltpu.CompilerParams(
            dimension_semantics=("parallel",),
            vmem_limit_bytes=vmem_limit,
        ),
    )(y, y, im_obs)

    # Final tiny cross-tile reduction in the wrapper (keeps the grid axis parallel).
    return jnp.sum(partials[:, 0, 0])


def _reference(y, im_obs):
    """Pure-JAX reference mirroring the PyTorch semantics."""
    if im_obs.ndim == 3:
        im_obs = im_obs[0]
    y0, y1 = y[0], y[1]
    M, N = y0.shape
    d_h = jnp.zeros((M, N), jnp.float32)
    d_h = d_h.at[:, 0].set(y0[:, 0])
    d_h = d_h.at[:, 1:-1].set(y0[:, 1:-1] - y0[:, :-2])
    d_h = d_h.at[:, -1].set(-y0[:, -2])
    d_v = jnp.zeros((M, N), jnp.float32)
    d_v = d_v.at[0, :].set(y1[0, :])
    d_v = d_v.at[1:-1, :].set(y1[1:-1, :] - y1[:-2, :])
    d_v = d_v.at[-1, :].set(-y1[-2, :])
    div = d_h + d_v
    return -0.5 * jnp.sum((im_obs - div) ** 2)


if __name__ == "__main__":
    key = jax.random.PRNGKey(0)
    # (M, N, row_tile): multi-tile, multi-tile with M not a multiple of 8, auto tile size.
    for (M, N, row_tile) in [(16, 128, 8), (20, 128, 8), (16, 128, None)]:
        key, k_y, k_img = jax.random.split(key, 3)
        # Dual variable in [-1, 1] (post L-inf projection range), observed image in [0, 1).
        y = jax.random.uniform(k_y, (2, M, N), dtype=jnp.float32) * 2.0 - 1.0
        im_obs = jax.random.uniform(k_img, (1, M, N), dtype=jnp.float32)

        nrg = dual_energy_rof(y, im_obs, row_tile=row_tile)
        nrg = jax.block_until_ready(nrg)

        ref = _reference(y, im_obs)
        assert nrg.dtype == jnp.float32
        assert jnp.allclose(nrg, ref, atol=1e-2, rtol=1e-5), (
            M, N, row_tile, float(nrg), float(ref))

    print("KERNEL_OK")
</pallas_src>

<mosaic_0001>
module attributes {stable_mosaic.version = 11 : i64} {
  func.func @_dual_energy_rof_kernel(%arg0: i32, %arg1: memref<2x8x128xf32, #tpu.memory_space<vmem>>, %arg2: memref<1x8x128xf32, #tpu.memory_space<vmem>>, %arg3: memref<1x8x128xf32, #tpu.memory_space<vmem>>, %arg4: memref<1x1x128xf32, #tpu.memory_space<vmem>>) attributes {dimension_semantics = [#tpu.dimension_semantics<parallel>], iteration_bounds = array<i64: 2>, scalar_prefetch = 0 : i64, scratch_operands = 0 : i64, tpu.core_type = #tpu.core_type<tc>, window_params = [{transform_indices = @transform_0, window_bounds = array<i64: 2, 8, 128>}, {transform_indices = @transform_1, window_bounds = array<i64: 1, 8, 128>}, {transform_indices = @transform_2, window_bounds = array<i64: 1, 8, 128>}, {transform_indices = @transform_3, window_bounds = array<i64: 1, 1, 128>}]} {
    %c0 = arith.constant 0 : index
    %c0_0 = arith.constant 0 : index
    %c0_1 = arith.constant 0 : index
    %0 = vector.load %arg1[%c0, %c0_0, %c0_1] : memref<2x8x128xf32, #tpu.memory_space<vmem>>, vector<1x8x128xf32>
    %1 = vector.shape_cast %0 : vector<1x8x128xf32> to vector<8x128xf32>
    %c1 = arith.constant 1 : index
    %c0_2 = arith.constant 0 : index
    %c0_3 = arith.constant 0 : index
    %2 = vector.load %arg1[%c1, %c0_2, %c0_3] : memref<2x8x128xf32, #tpu.memory_space<vmem>>, vector<1x8x128xf32>
    %3 = vector.shape_cast %2 : vector<1x8x128xf32> to vector<8x128xf32>
    %c0_4 = arith.constant 0 : index
    %c0_5 = arith.constant 0 : index
    %c0_6 = arith.constant 0 : index
    %4 = vector.load %arg3[%c0_4, %c0_5, %c0_6] : memref<1x8x128xf32, #tpu.memory_space<vmem>>, vector<1x8x128xf32>
    %5 = vector.shape_cast %4 : vector<1x8x128xf32> to vector<8x128xf32>
    %c8_i32 = arith.constant 8 : i32
    %6 = arith.muli %arg0, %c8_i32 : i32
    %7 = tpu.iota {dimensions = array<i32: 0>} : vector<8x1xi32>
    %8 = vector.broadcast %6 : i32 to vector<8x1xi32>
    %9 = arith.addi %7, %8 : vector<8x1xi32>
    %10 = tpu.iota {dimensions = array<i32: 1>} : vector<1x128xi32>
    %c127_i32 = arith.constant 127 : i32
    %11 = vector.broadcast %c127_i32 : i32 to vector<1x128xi32>
    %12 = arith.cmpi slt, %10, %11 : vector<1x128xi32>
    %cst = arith.constant 0.000000e+00 : f32
    %13 = vector.shape_cast %12 : vector<1x128xi1> to vector<1x128xi1>
    %14 = vector.broadcast %13 : vector<1x128xi1> to vector<8x128xi1>
    %15 = vector.broadcast %cst : f32 to vector<8x128xf32>
    %16 = arith.select %14, %1, %15 : vector<8x128xi1>, vector<8x128xf32>
    %c1_i32 = arith.constant 1 : i32
    %17 = tpu.dynamic_rotate %16 by %c1_i32 dim 1 : vector<8x128xf32>, i32 -> vector<8x128xf32>
    %18 = arith.subf %16, %17 : vector<8x128xf32>
    %c15_i32 = arith.constant 15 : i32
    %19 = vector.broadcast %c15_i32 : i32 to vector<8x1xi32>
    %20 = arith.cmpi ne, %9, %19 : vector<8x1xi32>
    %cst_7 = arith.constant 0.000000e+00 : f32
    %21 = vector.shape_cast %20 : vector<8x1xi1> to vector<8x1xi1>
    %22 = vector.broadcast %21 : vector<8x1xi1> to vector<8x128xi1>
    %23 = vector.broadcast %cst_7 : f32 to vector<8x128xf32>
    %24 = arith.select %22, %3, %23 : vector<8x128xi1>, vector<8x128xf32>
    %c0_i32 = arith.constant 0 : i32
    %25 = arith.cmpi eq, %arg0, %c0_i32 : i32
    %cst_8 = arith.constant 0.000000e+00 : f32
    %26 = vector.broadcast %cst_8 : f32 to vector<1x128xf32>
    %c0_9 = arith.constant 0 : index
    %c7 = arith.constant 7 : index
    %c0_10 = arith.constant 0 : index
    %27 = vector.load %arg2[%c0_9, %c7, %c0_10] : memref<1x8x128xf32, #tpu.memory_space<vmem>>, vector<1x1x128xf32>
    %28 = vector.shape_cast %27 : vector<1x1x128xf32> to vector<1x128xf32>
    %29 = arith.select %25, %26, %28 : vector<1x128xf32>
    %c1_i32_11 = arith.constant 1 : i32
    %30 = tpu.dynamic_rotate %24 by %c1_i32_11 dim 0 : vector<8x128xf32>, i32 -> vector<8x128xf32>
    %c0_i32_12 = arith.constant 0 : i32
    %31 = vector.broadcast %c0_i32_12 : i32 to vector<8x1xi32>
    %32 = arith.cmpi eq, %7, %31 : vector<8x1xi32>
    %33 = vector.shape_cast %32 : vector<8x1xi1> to vector<8x1xi1>
    %34 = vector.broadcast %33 : vector<8x1xi1> to vector<8x128xi1>
    %35 = vector.shape_cast %29 : vector<1x128xf32> to vector<1x128xf32>
    %36 = vector.broadcast %35 : vector<1x128xf32> to vector<8x128xf32>
    %37 = arith.select %34, %36, %30 : vector<8x128xi1>, vector<8x128xf32>
    %38 = arith.subf %24, %37 : vector<8x128xf32>
    %39 = arith.addf %18, %38 : vector<8x128xf32>
    %40 = arith.subf %5, %39 : vector<8x128xf32>
    %c16_i32 = arith.constant 16 : i32
    %41 = vector.broadcast %c16_i32 : i32 to vector<8x1xi32>
    %42 = arith.cmpi slt, %9, %41 : vector<8x1xi32>
    %cst_13 = arith.constant 0.000000e+00 : f32
    %43 = vector.shape_cast %42 : vector<8x1xi1> to vector<8x1xi1>
    %44 = vector.broadcast %43 : vector<8x1xi1> to vector<8x128xi1>
    %45 = vector.broadcast %cst_13 : f32 to vector<8x128xf32>
    %46 = arith.select %44, %40, %45 : vector<8x128xi1>, vector<8x128xf32>
    %47 = arith.mulf %46, %46 : vector<8x128xf32>
    %48 = vector.shape_cast %47 : vector<8x128xf32> to vector<1x8x128xf32>
    %cst_14 = arith.constant dense<0.000000e+00> : vector<1xf32>
    %49 = vector.multi_reduction <add>, %48, %cst_14 [1, 2] : vector<1x8x128xf32> to vector<1xf32>
    %50 = vector.shape_cast %49 : vector<1xf32> to vector<1x1x1xf32>
    %51 = vector.extract %50[0, 0, 0] : f32 from vector<1x1x1xf32>
    %cst_15 = arith.constant -5.000000e-01 : f32
    %52 = arith.mulf %cst_15, %51 : f32
    %53 = vector.broadcast %52 : f32 to vector<1x1x128xf32>
    %c0_16 = arith.constant 0 : index
    %c0_17 = arith.constant 0 : index
    %c0_18 = arith.constant 0 : index
    %54 = vector.load %arg4[%c0_16, %c0_17, %c0_18] : memref<1x1x128xf32, #tpu.memory_space<vmem>>, vector<1x1x128xf32>
    tpu.vector_store %arg4[%c0_16, %c0_17, %c0_18], %53 {strides = array<i32>} : memref<1x1x128xf32, #tpu.memory_space<vmem>>, vector<1x1x128xf32>,
    return
  }
  func.func @transform_0(%arg0: i32) -> (i32, i32, i32) {
    %c0_i32 = arith.constant 0 : i32
    %c0_i32_0 = arith.constant 0 : i32
    %c0_i32_1 = arith.constant 0 : i32
    return %c0_i32, %arg0, %c0_i32_0 : i32, i32, i32
  }
  func.func @transform_1(%arg0: i32) -> (i32, i32, i32) {
    %c1_i32 = arith.constant 1 : i32
    %0 = arith.muli %arg0, %c1_i32 : i32
    %c1_i32_0 = arith.constant 1 : i32
    %1 = arith.subi %0, %c1_i32_0 : i32
    %c0_i32 = arith.constant 0 : i32
    %2 = arith.maxsi %1, %c0_i32 : i32
    %c1_i32_1 = arith.constant 1 : i32
    %c0_i32_2 = arith.constant 0 : i32
    %c0_i32_3 = arith.constant 0 : i32
    return %c1_i32_1, %2, %c0_i32_2 : i32, i32, i32
  }
  func.func @transform_2(%arg0: i32) -> (i32, i32, i32) {
    %c0_i32 = arith.constant 0 : i32
    %c0_i32_0 = arith.constant 0 : i32
    %c0_i32_1 = arith.constant 0 : i32
    return %c0_i32, %arg0, %c0_i32_0 : i32, i32, i32
  }
  func.func @transform_3(%arg0: i32) -> (i32, i32, i32) {
    %c0_i32 = arith.constant 0 : i32
    %c0_i32_0 = arith.constant 0 : i32
    %c0_i32_1 = arith.constant 0 : i32
    return %arg0, %c0_i32, %c0_i32_0 : i32, i32, i32
  }
}

</mosaic_0001>

<llo_original>
// kernel: dual_energy_rof.1
$region0: #{dual_energy_rof.1}
  #allocation0 [shape = 'u32[]', space=smem, size = 0x4, offset = 0x4, fixed_abs, tag = 'smem constant byte address 0x4 - core index']
  #allocation1 [shape = 'u32[144,128]{1,0:T(1,128)}', space=vmem, size = 0x12000, scoped, tag = 'internal scratch']
  %s0 = inlined_call_operand.hbm [shape: f32[2,16,128], index: 0, kind: input, shape index: {}, may-alias: {0,1}]
  %s1 = inlined_call_operand.hbm [shape: f32[2,16,128], index: 1, kind: input, shape index: {}, may-alias: {0,1}]
  %s2 = inlined_call_operand.hbm [shape: f32[1,16,128], index: 2, kind: input, shape index: {}]
  %s3 = inlined_call_operand.vmem [shape: f32[2,1,128], index: 3, kind: output, shape index: {}]
  %s4 = sld [smem:[#allocation0]]
  $region57: #{dual_energy_rof.1} parent=0
    _
  %s6 = ssub.s32 1, %s4
  %s7 = scalar_select 0, %s6, %s4
  $region1: #{dual_energy_rof.1} parent=0
    #allocation2 [shape = 'u8[16384]{0}', space=vmem, size = 0x4000, scoped, tag = 'input window, operand 0']
    #allocation3 [shape = 's32[2]{0}', space=sflag, size = 0x8, scoped, tag = 'scoped memory for dual_energy_rof.1']
    #allocation4 [shape = 'u8[8192]{0}', space=vmem, size = 0x2000, scoped, tag = 'input window, operand 1']
    #allocation5 [shape = 's32[2]{0}', space=sflag, size = 0x8, scoped, tag = 'scoped memory for dual_energy_rof.1']
    #allocation6 [shape = 'u8[8192]{0}', space=vmem, size = 0x2000, scoped, tag = 'input window, operand 2']
    %8 = vsyncpa [#allocation3], 0
    %s9 = scalar_lea.sflag [#allocation3], 1
    %10 = vsyncpa %s9, 0
    %11 = vsyncpa [#allocation5], 0
    %s12 = scalar_lea.sflag [#allocation5], 1
    %13 = vsyncpa %s12, 0
    loop: start=0, step=1, limit=4
    $region2: #{dual_energy_rof.1} parent=1 // loop_pre_header
      _
    $region3: #{dual_energy_rof.1} parent=1 // loop_header
      %s15 = sphi 0, %s19
      %p16 = scmp.ge.s32.totalorder %s15, 4
      %s25 = sphi 0, %s27
      %s28 = sphi 0, %s25
      %s29 = sphi 0, %s28
      %s45 = sphi 0, %s29
      %s57 = sphi 0, %s59
      %s60 = sphi 0, %s57
      %s61 = sphi 0, %s60
      %s77 = sphi 0, %s61
      %s83 = sphi 0, %s85
      %s86 = sphi 0, %s83
      %s87 = sphi 0, %s86
      %s103 = sphi 0, %s87
      %s109 = sphi 0, %s111
      %s112 = sphi 0, %s109
      %s113 = sphi 0, %s112
      %s129 = sphi 0, %s113
    $region4: #{dual_energy_rof.1} parent=1 // loop_header_branch
      %18 = sbr.rel (%p16) target = $region8
    $region5: #{dual_energy_rof.1} parent=1 // loop_body
      %s20 = ssub.s32 %s15, 1
      %s21 = ssub.s32 %s15, 2
      %s22 = sadd.s32 %s15, 1
      %s23 = ssub.s32 %s15, %s22
      %p24 = scmp.eq.s32.totalorder %s23, 0
      %s26 = sadd.s32 %s25, 1
      %s27 = scalar_select %p24, %s25, %s26
      %p30 = pneg %p24
      %p31 = scmp.eq.s32.totalorder %s15, 1
      %p32 = por %p30, %p31
      %p33 = scmp.ne.s32.totalorder %s25, %s28
      %p34 = scmp.eq.s32.totalorder %s15, 0
      %p35 = por %p33, %p34
      %p36 = scmp.ne.s32.totalorder %s25, %s28
      %p37 = scmp.eq.s32.totalorder %s20, 1
      %p38 = por %p36, %p37
      %p39 = scmp.ne.s32.totalorder %s28, %s29
      %p40 = scmp.eq.s32.totalorder %s20, 0
      %p41 = por %p39, %p40
      %p42 = scmp.ne.s32.totalorder %s28, %s29
      %p43 = scmp.eq.s32.totalorder %s21, 1
      %p44 = por %p42, %p43
      %p46 = scmp.ne.s32.totalorder %s29, %s45
      %p47 = scmp.eq.s32.totalorder %s21, 0
      %p48 = por %p46, %p47
      %s49 = ssub.s32 %s15, 1
      %p50 = scmp.gt.s32.totalorder %s49, 0
      %s51 = scalar_select %p50, %s49, 0
      %s52 = ssub.s32 %s22, 1
      %p53 = scmp.gt.s32.totalorder %s52, 0
      %s54 = scalar_select %p53, %s52, 0
      %s55 = ssub.s32 %s51, %s54
      %p56 = scmp.eq.s32.totalorder %s55, 0
      %s58 = sadd.s32 %s57, 1
      %s59 = scalar_select %p56, %s57, %s58
      %p62 = pneg %p56
      %p63 = scmp.eq.s32.totalorder %s15, 1
      %p64 = por %p62, %p63
      %p65 = scmp.ne.s32.totalorder %s57, %s60
      %p66 = scmp.eq.s32.totalorder %s15, 0
      %p67 = por %p65, %p66
      %p68 = scmp.ne.s32.totalorder %s57, %s60
      %p69 = scmp.eq.s32.totalorder %s20, 1
      %p70 = por %p68, %p69
      %p71 = scmp.ne.s32.totalorder %s60, %s61
      %p72 = scmp.eq.s32.totalorder %s20, 0
      %p73 = por %p71, %p72
      %p74 = scmp.ne.s32.totalorder %s60, %s61
      %p75 = scmp.eq.s32.totalorder %s21, 1
      %p76 = por %p74, %p75
      %p78 = scmp.ne.s32.totalorder %s61, %s77
      %p79 = scmp.eq.s32.totalorder %s21, 0
      %p80 = por %p78, %p79
      %s81 = ssub.s32 %s15, %s22
      %p82 = scmp.eq.s32.totalorder %s81, 0
      %s84 = sadd.s32 %s83, 1
      %s85 = scalar_select %p82, %s83, %s84
      %p88 = pneg %p82
      %p89 = scmp.eq.s32.totalorder %s15, 1
      %p90 = por %p88, %p89
      %p91 = scmp.ne.s32.totalorder %s83, %s86
      %p92 = scmp.eq.s32.totalorder %s15, 0
      %p93 = por %p91, %p92
      %p94 = scmp.ne.s32.totalorder %s83, %s86
      %p95 = scmp.eq.s32.totalorder %s20, 1
      %p96 = por %p94, %p95
      %p97 = scmp.ne.s32.totalorder %s86, %s87
      %p98 = scmp.eq.s32.totalorder %s20, 0
      %p99 = por %p97, %p98
      %p100 = scmp.ne.s32.totalorder %s86, %s87
      %p101 = scmp.eq.s32.totalorder %s21, 1
      %p102 = por %p100, %p101
      %p104 = scmp.ne.s32.totalorder %s87, %s103
      %p105 = scmp.eq.s32.totalorder %s21, 0
      %p106 = por %p104, %p105
      %s107 = ssub.s32 %s15, %s22
      %p108 = scmp.eq.s32.totalorder %s107, 0
      %s110 = sadd.s32 %s109, 1
      %s111 = scalar_select %p108, %s109, %s110
      %p114 = pneg %p108
      %p115 = scmp.eq.s32.totalorder %s15, 1
      %p116 = por %p114, %p115
      %p117 = scmp.ne.s32.totalorder %s109, %s112
      %p118 = scmp.eq.s32.totalorder %s15, 0
      %p119 = por %p117, %p118
      %p120 = scmp.ne.s32.totalorder %s109, %s112
      %p121 = scmp.eq.s32.totalorder %s20, 1
      %p122 = por %p120, %p121
      %p123 = scmp.ne.s32.totalorder %s112, %s113
      %p124 = scmp.eq.s32.totalorder %s20, 0
      %p125 = por %p123, %p124
      %p126 = scmp.ne.s32.totalorder %s112, %s113
      %p127 = scmp.eq.s32.totalorder %s21, 1
      %p128 = por %p126, %p127
      %p130 = scmp.ne.s32.totalorder %s113, %s129
      %p131 = scmp.eq.s32.totalorder %s21, 0
      %p132 = por %p130, %p131
      %p133 = scmp.le.s32.totalorder 1, %s15
      %p134 = scmp.lt.s32.totalorder %s15, 3
      %p135 = pnand %p133, %p134
      %p136 = pneg %p135
      // Predicated region
      $region9: #{dual_energy_rof.1} parent=5 // pred_check
        _
      $region10: #{dual_energy_rof.1} parent=5 // pred_check_branch
        %138 = sbr.rel (%p135) target = $region12
      $region11: #{dual_energy_rof.1} parent=5 // pred_region
        %s139 = ssub.s32 %s15, 1
      $region12: #{dual_energy_rof.1} parent=5 // pred_fallthru
        _
      %p140 = scmp.lt.s32.totalorder %s15, 2
      // Predicated region
      $region13: #{dual_energy_rof.1} parent=5 // pred_check
        %p141 = pneg %p140
      $region14: #{dual_energy_rof.1} parent=5 // pred_check_branch
        %143 = sbr.rel (%p141) target = $region16
      $region15: #{dual_energy_rof.1} parent=5 // pred_region
        // Predicated region
        $region17: #{dual_energy_rof.1} parent=15 // pred_check
          %p144 = pneg %p35
        $region18: #{dual_energy_rof.1} parent=15 // pred_check_branch
          %146 = sbr.rel (%p144) target = $region20
        $region19: #{dual_energy_rof.1} parent=15 // pred_region
          %s147 = sand.u32 %s25, 1
          %s148 = scalar_lea.sflag [#allocation3], %s147
          %s149 = sand.u32 %s25, 1
          %s150 = smul.addr %s149, 16
          %s151 = scalar_lea.vmem [#allocation2], %s150
          %s153 = ssub.s32 256, 256
          %154 = vsyncadd %s148, %s153
          %s155 = smul.addr %s15, 128
          %s156 = scalar_lea.hbm %s0, %s155
          %s157 = sshll.u32 %s151, 4
          %s158 = int_to_ptr.vmem [resolvable:$true] %s157
          %163 = dma.hbm_to_vmem [thread:$0]  %s156, 256, %s158, %s148, 256, 128, 8
        $region20: #{dual_energy_rof.1} parent=15 // pred_fallthru
          _
        // Predicated region
        $region21: #{dual_energy_rof.1} parent=15 // pred_check
          %p164 = pneg %p67
        $region22: #{dual_energy_rof.1} parent=15 // pred_check_branch
          %166 = sbr.rel (%p164) target = $region24
        $region23: #{dual_energy_rof.1} parent=15 // pred_region
          %s167 = sand.u32 %s15, 1
          %s168 = scalar_lea.sflag [#allocation5], %s167
          %s169 = sand.u32 %s57, 1
          %s170 = smul.addr %s169, 8
          %s171 = scalar_lea.vmem [#allocation4], %s170
          %s172 = ssub.s32 %s15, 1
          %p173 = scmp.gt.s32.totalorder %s172, 0
          %s174 = scalar_select %p173, %s172, 0
          %s176 = ssub.s32 128, 128
          %177 = vsyncadd %s168, %s176
          %s178 = sadd.s32 %s174, 2
          %s179 = smul.addr %s178, 128
          %s180 = scalar_lea.hbm %s1, %s179
          %s182 = sshll.u32 %s171, 4
          %s183 = int_to_ptr.vmem [resolvable:$true] %s182
          %185 = dma.hbm_to_vmem [thread:$0]  %s180, 128, %s183, %s168
        $region24: #{dual_energy_rof.1} parent=15 // pred_fallthru
          _
        // Predicated region
        $region25: #{dual_energy_rof.1} parent=15 // pred_check
          %p186 = pneg %p93
        $region26: #{dual_energy_rof.1} parent=15 // pred_check_branch
          %188 = sbr.rel (%p186) target = $region28
        $region27: #{dual_energy_rof.1} parent=15 // pred_region
          %s189 = sand.u32 %s15, 1
          %s190 = scalar_lea.sflag [#allocation5], %s189
          %s191 = sand.u32 %s83, 1
          %s192 = smul.addr %s191, 8
          %s193 = scalar_lea.vmem [#allocation6], %s192
          %s195 = ssub.s32 128, 128
          %196 = vsyncadd %s190, %s195
          %s197 = smul.addr %s15, 128
          %s198 = scalar_lea.hbm %s2, %s197
          %s200 = sshll.u32 %s193, 4
          %s201 = int_to_ptr.vmem [resolvable:$true] %s200
          %203 = dma.hbm_to_vmem [thread:$0]  %s198, 128, %s201, %s190
        $region28: #{dual_energy_rof.1} parent=15 // pred_fallthru
          _
      $region16: #{dual_energy_rof.1} parent=5 // pred_fallthru
        _
      %p204 = scmp.le.s32.totalorder 1, %s15
      %p205 = scmp.lt.s32.totalorder %s15, 3
      %p206 = pnand %p204, %p205
      %p207 = pneg %p206
      // Predicated region
      $region29: #{dual_energy_rof.1} parent=5 // pred_check
        _
      $region30: #{dual_energy_rof.1} parent=5 // pred_check_branch
        %209 = sbr.rel (%p206) target = $region32
      $region31: #{dual_energy_rof.1} parent=5 // pred_region
        %s210 = ssub.s32 %s15, 1
        %s211 = sand.u32 %s28, 1
        %s212 = scalar_lea.sflag [#allocation3], %s211
        %s213 = sand.u32 %s28, 1
        %s214 = smul.addr %s213, 16
        %s215 = scalar_lea.vmem [#allocation2], %s214
        // Predicated region
        $region33: #{dual_energy_rof.1} parent=31 // pred_check
          %p216 = pneg %p41
        $region34: #{dual_energy_rof.1} parent=31 // pred_check_branch
          %218 = sbr.rel (%p216) target = $region36
        $region35: #{dual_energy_rof.1} parent=31 // pred_region
          %219 = dma.done %s212, 256
        $region36: #{dual_energy_rof.1} parent=31 // pred_fallthru
          _
        %s220 = sand.u32 %s20, 1
        %s221 = scalar_lea.sflag [#allocation5], %s220
        %s222 = sand.u32 %s60, 1
        %s223 = smul.addr %s222, 8
        %s224 = scalar_lea.vmem [#allocation4], %s223
        // Predicated region
        $region37: #{dual_energy_rof.1} parent=31 // pred_check
          %p225 = pneg %p73
        $region38: #{dual_energy_rof.1} parent=31 // pred_check_branch
          %227 = sbr.rel (%p225) target = $region40
        $region39: #{dual_energy_rof.1} parent=31 // pred_region
          %228 = dma.done %s221, 128
        $region40: #{dual_energy_rof.1} parent=31 // pred_fallthru
          _
        %s229 = sand.u32 %s20, 1
        %s230 = scalar_lea.sflag [#allocation5], %s229
        %s231 = sand.u32 %s86, 1
        %s232 = smul.addr %s231, 8
        %s233 = scalar_lea.vmem [#allocation6], %s232
        // Predicated region
        $region41: #{dual_energy_rof.1} parent=31 // pred_check
          %p234 = pneg %p99
        $region42: #{dual_energy_rof.1} parent=31 // pred_check_branch
          %236 = sbr.rel (%p234) target = $region44
        $region43: #{dual_energy_rof.1} parent=31 // pred_region
          %237 = dma.done %s230, 128
        $region44: #{dual_energy_rof.1} parent=31 // pred_fallthru
          _
        %s238 = sand.u32 %s28, 1
        %s239 = scalar_lea.sflag [#allocation3], %s238
        %s240 = sand.u32 %s28, 1
        %s241 = smul.addr %s240, 16
        %s242 = scalar_lea.vmem [#allocation2], %s241
        %p243 = pneg %p41
        %p244 = pneg %p38
        %s245 = sand.u32 %s20, 1
        %s246 = scalar_lea.sflag [#allocation5], %s245
        %s247 = sand.u32 %s60, 1
        %s248 = smul.addr %s247, 8
        %s249 = scalar_lea.vmem [#allocation4], %s248
        %p250 = pneg %p73
        %p251 = pneg %p70
        %s252 = sand.u32 %s20, 1
        %s253 = scalar_lea.sflag [#allocation5], %s252
        %s254 = sand.u32 %s86, 1
        %s255 = smul.addr %s254, 8
        %s256 = scalar_lea.vmem [#allocation6], %s255
        %p257 = pneg %p99
        %p258 = pneg %p96
        %p259 = pneg %p125
        %p260 = pneg %p122
        %p261 = scmp.lt.s32.totalorder %s20, 1
        %s262 = scalar_select %p261, %s20, 1
        %s263 = scalar_lea.vmem %s3, %s262
        %s264 = ssub.s32 %s20, 1
        %p265 = scmp.gt.s32.totalorder %s264, 0
        %s266 = scalar_select %p265, %s264, 0
        %p267 = scmp.lt.s32.totalorder %s20, 1
        %s268 = scalar_select %p267, %s20, 1
        %s269 = scalar_lea.vmem %s3, %s268
        %v270 = vld [vmem:[%s215] sm:$0xff]
        %s271 = scalar_lea.vmem %s215, 8 [#allocation2]
        %v272 = vld [vmem:[%s271] sm:$0xff]
        %v273 = vld [vmem:[%s233] sm:$0xff]
        %s274 = smul.u32 %s20, 8
        %v275 = vlaneseq
        %v276 = vshrl.u32 %v275, 7
        %v277 = vstv %s274
        %v278 = vadd.s32 %v276, %v277
        %v279 = vlaneseq
        %v280 = vand.u32 %v279, 127
        %vm281 = vcmp.lt.s32.totalorder %v280, 127
        %v282 = vsel %vm281, 1, 0
        %vm283 = vcmp.eq.s32.totalorder %v282, 1
        %v284 = vsel %vm283, %v270, 0.0
        %285 = vrot.lane.b32.xlu0 %v284, 1
        %v286 = vpop.permute.xlu0 %285
        %v287 = vsub.f32 %v284, %v286
        %vm288 = vcmp.ne.s32.totalorder %v278, 15
        %v289 = vsel %vm288, 1, 0
        %vm290 = vcmp.eq.s32.totalorder %v289, 1
        %v291 = vsel %vm290, %v272, 0.0
        %p292 = scmp.eq.s32.totalorder %s20, 0
        %v293 = vld [vmem:[%s224 + $0x7] sm:$0x1]
        %s294 = scalar_select %p292, 1, 0
        %v295 = vstv %s294
        %vm296 = vcmp.eq.s32.totalorder %v295, 1
        %v297 = vsel %vm296, 0.0, %v293
        %v298 = vrot.slane %v291, 7
        %vm299 = vcmp.eq.s32.totalorder %v276, 0
        %v300 = vsel %vm299, 1, 0
        %vm301 = vcmp.eq.s32.totalorder %v300, 1
        %v302 = vlaneseq
        %v303 = vshrl.u32 %v302, 7
        %v304 = vsub.s32 0, %v303
        %v305 = vrot.slane %v297, %v304
        %v306 = vsel %vm301, %v305, %v298
        %v307 = vsub.f32 %v291, %v306
        %v308 = vadd.f32 %v287, %v307
        %v309 = vsub.f32 %v273, %v308
        %vm310 = vcmp.lt.s32.totalorder %v278, 16
        %v311 = vsel %vm310, 1, 0
        %vm312 = vcmp.eq.s32.totalorder %v311, 1
        %v313 = vsel %vm312, %v309, 0.0
        %v314 = vmul.f32 %v313, %v313
        %315 = vadd.xlane.f32.xlu0 %v314
        %v316 = vpop.xlane.xlu0 %315
        %v317 = vrot.slane %v316, 4
        %v318 = vadd.f32 %v316, %v317
        %v319 = vrot.slane %v318, 2
        %v320 = vadd.f32 %v318, %v319
        %v321 = vrot.slane %v320, 1
        %v322 = vadd.f32 %v320, %v321
        %s323 = vtos %v322
        %s324 = smul.f32 %s323, -0.5
        %v325 = vstv %s324
        %326 = vst [vmem:[%s269] sm:$0x1] %v325
        %p327 = scmp.lt.s32.totalorder %s20, 1
        %s328 = scalar_select %p327, %s20, 1
        %s329 = scalar_lea.vmem %s3, %s328
        // Predicated region
        $region45: #{dual_energy_rof.1} parent=31 // pred_check
          %p330 = pneg %p122
        $region46: #{dual_energy_rof.1} parent=31 // pred_check_branch
          %332 = sbr.rel (%p330) target = $region48
        $region47: #{dual_energy_rof.1} parent=31 // pred_region
          _
        $region48: #{dual_energy_rof.1} parent=31 // pred_fallthru
          _
      $region32: #{dual_energy_rof.1} parent=5 // pred_fallthru
        _
      %p333 = scmp.le.s32.totalorder 2, %s15
      // Predicated region
      $region49: #{dual_energy_rof.1} parent=5 // pred_check
        %p334 = pneg %p333
      $region50: #{dual_energy_rof.1} parent=5 // pred_check_branch
        %336 = sbr.rel (%p334) target = $region52
      $region51: #{dual_energy_rof.1} parent=5 // pred_region
        %s337 = ssub.s32 %s15, 2
        // Predicated region
        $region53: #{dual_energy_rof.1} parent=51 // pred_check
          %p338 = pneg %p128
        $region54: #{dual_energy_rof.1} parent=51 // pred_check_branch
          %340 = sbr.rel (%p338) target = $region56
        $region55: #{dual_energy_rof.1} parent=51 // pred_region
          %p341 = scmp.lt.s32.totalorder %s21, 1
          %s342 = scalar_select %p341, %s21, 1
          %s343 = scalar_lea.vmem %s3, %s342
        $region56: #{dual_energy_rof.1} parent=51 // pred_fallthru
          _
      $region52: #{dual_energy_rof.1} parent=5 // pred_fallthru
        _
    $region6: #{dual_energy_rof.1} parent=1 // loop_footer
      %s19 = sadd.s32 1, %s15
    $region7: #{dual_energy_rof.1} parent=1 // loop_footer_branch
      %14 = sbr.rel target = $region3
    $region8: #{dual_energy_rof.1} parent=1 // loop_exit
      _
    %344 = vsyncpa [#allocation3], 1
    %s345 = scalar_lea.sflag [#allocation3], 1
    %346 = vsyncpa %s345, 1
    %347 = vsyncpa [#allocation5], 1
    %s348 = scalar_lea.sflag [#allocation5], 1
    %349 = vsyncpa %s348, 1

</llo_original>
